<compile_context>
chip_gen: v6e
topology: v6e:2x2x1
jax: 0.10.0
libtpu: 0.0.40
codegen_flags: <defaults>
</compile_context>

<pallas_src>
import jax
import jax.numpy as jnp
from jax import lax
from jax.experimental import pallas as pl
from jax.experimental.pallas import tpu as pltpu


def _make_kernel(*, kernel_size, stride, dilation, eps, have_halo, use_mxu, mxu_dtype):
    """Builds the fused depthwise-separable-conv kernel body (all params static)."""

    def kernel(*refs):
        if have_halo:
            (x_cur_ref, x_nxt_ref, wdw_ref, bdw_ref, g1_ref, be1_ref,
             wpw_ref, bpw_ref, g2_ref, be2_ref, out_ref) = refs
        else:
            (x_cur_ref, wdw_ref, bdw_ref, g1_ref, be1_ref,
             wpw_ref, bpw_ref, g2_ref, be2_ref, out_ref) = refs
            x_nxt_ref = None

        c_in = x_cur_ref.shape[1]
        c_out = out_ref.shape[1]
        tb = out_ref.shape[2]          # output time-tile width (lane-dense)

        # ---- build the contiguous input window (current block + right halo) ----
        x_cur = x_cur_ref[0].astype(jnp.float32)                 # (C_in, IN_BW)
        if have_halo:
            x_halo = x_nxt_ref[0].astype(jnp.float32)            # (C_in, HW)
            xwin = jnp.concatenate([x_cur, x_halo], axis=-1)
        else:
            xwin = x_cur

        # ---- depthwise conv: unrolled MAC over kernel taps (contiguous lane loads) ----
        wdw = wdw_ref[...].astype(jnp.float32)                   # (C_in, K)
        acc = jnp.zeros((c_in, tb), jnp.float32)
        span = (tb - 1) * stride + 1
        for k in range(kernel_size):
            start = k * dilation
            if stride == 1:
                xs = lax.slice_in_dim(xwin, start, start + tb, axis=1)
            else:
                # TODO(synk): strided lane slice goes through the XLU; if stride>1 is
                # ever hot, deinterleave time in the wrapper instead.
                xs = lax.slice_in_dim(xwin, start, start + span, stride=stride, axis=1)
            acc = acc + wdw[:, k:k + 1] * xs
        acc = acc + bdw_ref[...].astype(jnp.float32)             # (C_in, 1) broadcast

        # ---- LayerNorm over channels (single fused sweep: sum + sum-of-squares) + ReLU ----
        inv_cin = 1.0 / c_in
        m1 = jnp.sum(acc, axis=0, keepdims=True) * inv_cin
        q1 = jnp.sum(acc * acc, axis=0, keepdims=True) * inv_cin
        var1 = jnp.maximum(q1 - m1 * m1, 0.0)
        y = (acc - m1) * lax.rsqrt(var1 + eps)
        y = y * g1_ref[...].astype(jnp.float32) + be1_ref[...].astype(jnp.float32)
        y = jnp.maximum(y, 0.0)

        # ---- pointwise 1x1 conv (channel contraction) ----
        if use_mxu:
            z = jnp.dot(wpw_ref[...].astype(mxu_dtype), y.astype(mxu_dtype),
                        preferred_element_type=jnp.float32)
        else:
            # Tiny channel counts: VPU broadcast-MAC, skip the MXU entirely.
            w_pw = wpw_ref[...].astype(jnp.float32)
            z = jnp.zeros((c_out, tb), jnp.float32)
            for c in range(c_in):
                z = z + w_pw[:, c:c + 1] * y[c:c + 1, :]
        z = z + bpw_ref[...].astype(jnp.float32)

        # ---- LayerNorm over channels + ReLU ----
        inv_cout = 1.0 / c_out
        m2 = jnp.sum(z, axis=0, keepdims=True) * inv_cout
        q2 = jnp.sum(z * z, axis=0, keepdims=True) * inv_cout
        var2 = jnp.maximum(q2 - m2 * m2, 0.0)
        o = (z - m2) * lax.rsqrt(var2 + eps)
        o = o * g2_ref[...].astype(jnp.float32) + be2_ref[...].astype(jnp.float32)
        o = jnp.maximum(o, 0.0)

        out_ref[0] = o.astype(out_ref.dtype)

    return kernel


def depthwise_separable_conv(x, params, *, kernel_size, stride, padding, dilation,
                             eps=1e-5, block_t=512, mxu_operand_dtype=jnp.float32):
    """x: [B, C_in, T].  params: PyTorch-shaped weights of DepthwiseSeparableConv."""
    wdw, bdw, g1, be1, wpw, bpw, g2, be2 = params
    B, C_in, T = x.shape
    C_out = wpw.shape[0]

    halo = dilation * (kernel_size - 1)
    T_out = (T + 2 * padding - halo - 1) // stride + 1
    assert T_out > 0, "invalid conv geometry"

    # ------------------------ choose time tiling ------------------------
    tail = max(halo + 1 - stride, 0)       # extra input cols needed beyond a tile's span
    if T_out < 128:
        tiled = False
        tb = T_out
        nt = 1
    else:
        tiled = True
        tb = max(128, (min(block_t, T_out) // 128) * 128)
        while tb * stride < max(tail, 1):  # tile's own span must cover the halo tail
            tb += 128
        nt = (T_out + tb - 1) // tb

    in_bw = tb * stride                    # input cols consumed per tile (before halo)

    # halo ("next block") view width: smallest multiple of 128 that covers `tail`
    # and divides in_bw (so a Blocked index_map can address it exactly).
    if tiled and tail > 0:
        hw = in_bw
        for cand in range(128, in_bw + 1, 128):
            if cand >= tail and in_bw % cand == 0:
                hw = cand
                break
    else:
        hw = 0

    # ---------------- pad the time axis (conv padding + block alignment) ----------------
    if tiled:
        t_in_len = max(nt * in_bw + hw, T + 2 * padding)
    else:
        t_in_len = T + 2 * padding
    x_pad = jnp.pad(x, ((0, 0), (0, 0), (padding, t_in_len - T - padding)))

    # ---------------- reshape PyTorch params into 2-D VMEM-friendly tiles ----------------
    wdw2 = wdw.reshape(C_in, kernel_size)
    wpw2 = wpw.reshape(C_out, C_in)
    bdw2 = bdw.reshape(C_in, 1)
    g1_2 = g1.reshape(C_in, 1)
    be1_2 = be1.reshape(C_in, 1)
    bpw2 = bpw.reshape(C_out, 1)
    g2_2 = g2.reshape(C_out, 1)
    be2_2 = be2.reshape(C_out, 1)

    use_mxu = C_in >= 32
    if use_mxu and mxu_operand_dtype != jnp.float32:
        wpw2 = wpw2.astype(mxu_operand_dtype)   # halve pointwise-weight DMA as well

    kernel = _make_kernel(kernel_size=kernel_size, stride=stride, dilation=dilation,
                          eps=eps, have_halo=hw > 0, use_mxu=use_mxu,
                          mxu_dtype=mxu_operand_dtype)

    # ---------------------------- BlockSpecs ----------------------------
    def const_spec(shape):
        return pl.BlockSpec(shape, lambda b, t: (0, 0))

    if tiled:
        x_cur_spec = pl.BlockSpec((1, C_in, in_bw), lambda b, t: (b, 0, t))
    else:
        x_cur_spec = pl.BlockSpec((1, C_in, t_in_len), lambda b, t: (b, 0, 0))

    in_specs = [x_cur_spec]
    args = [x_pad]
    if hw > 0:
        ratio = in_bw // hw
        in_specs.append(
            pl.BlockSpec((1, C_in, hw), lambda b, t: (b, 0, (t + 1) * ratio)))
        args.append(x_pad)

    in_specs += [const_spec(wdw2.shape), const_spec(bdw2.shape),
                 const_spec(g1_2.shape), const_spec(be1_2.shape),
                 const_spec(wpw2.shape), const_spec(bpw2.shape),
                 const_spec(g2_2.shape), const_spec(be2_2.shape)]
    args += [wdw2, bdw2, g1_2, be1_2, wpw2, bpw2, g2_2, be2_2]

    out_spec = pl.BlockSpec((1, C_out, tb), lambda b, t: (b, 0, t))

    # ------------------------- cost estimate (scheduler hint) -------------------------
    flops = B * T_out * (2 * kernel_size * C_in + 2 * C_in * C_out + 8 * (C_in + C_out))
    transcendentals = 2 * B * T_out
    bytes_accessed = 4 * (B * C_in * t_in_len + B * C_out * T_out
                          + C_in * kernel_size + C_in * C_out + 3 * (C_in + C_out))
    ce = pl.CostEstimate(flops=int(flops), transcendentals=int(transcendentals),
                         bytes_accessed=int(bytes_accessed))

    return pl.pallas_call(
        kernel,
        out_shape=jax.ShapeDtypeStruct((B, C_out, T_out), x.dtype),
        grid=(B, nt),
        in_specs=in_specs,
        out_specs=out_spec,
        compiler_params=pltpu.CompilerParams(
            dimension_semantics=("parallel", "parallel"),
            vmem_limit_bytes=32 * 1024 * 1024),
        cost_estimate=ce,
    )(*args)


def _reference(x, params, *, kernel_size, stride, padding, dilation, eps=1e-5,
               pointwise_dtype=jnp.float32):
    """Plain-JAX reference matching the PyTorch module semantics."""
    wdw, bdw, g1, be1, wpw, bpw, g2, be2 = params
    C_in = x.shape[1]

    y = lax.conv_general_dilated(
        x, wdw, window_strides=(stride,), padding=[(padding, padding)],
        rhs_dilation=(dilation,), feature_group_count=C_in,
        dimension_numbers=("NCH", "OIH", "NCH")) + bdw[None, :, None]

    def ln(a, g, b):
        m = a.mean(axis=1, keepdims=True)
        v = ((a - m) ** 2).mean(axis=1, keepdims=True)
        return (a - m) / jnp.sqrt(v + eps) * g[None, :, None] + b[None, :, None]

    y = jax.nn.relu(ln(y, g1, be1))
    z = lax.conv_general_dilated(
        y.astype(pointwise_dtype), wpw.astype(pointwise_dtype),
        window_strides=(1,), padding=[(0, 0)],
        dimension_numbers=("NCH", "OIH", "NCH"),
        preferred_element_type=jnp.float32) + bpw[None, :, None]
    return jax.nn.relu(ln(z, g2, be2))


if __name__ == "__main__":
    def make_params(key, c_in, c_out, k):
        ks = jax.random.split(key, 8)
        wdw = 0.5 * jax.random.normal(ks[0], (c_in, 1, k), jnp.float32)
        bdw = 0.1 * jax.random.normal(ks[1], (c_in,), jnp.float32)
        g1 = 1.0 + 0.1 * jax.random.normal(ks[2], (c_in,), jnp.float32)
        be1 = 0.1 * jax.random.normal(ks[3], (c_in,), jnp.float32)
        wpw = 0.5 * jax.random.normal(ks[4], (c_out, c_in, 1), jnp.float32)
        bpw = 0.1 * jax.random.normal(ks[5], (c_out,), jnp.float32)
        g2 = 1.0 + 0.1 * jax.random.normal(ks[6], (c_out,), jnp.float32)
        be2 = 0.1 * jax.random.normal(ks[7], (c_out,), jnp.float32)
        return (wdw, bdw, g1, be1, wpw, bpw, g2, be2)

    root = jax.random.PRNGKey(0)
    k1, k2, k3, k4, k5, k6 = jax.random.split(root, 6)

    # --- config 1: small shapes, single full-T block, VPU pointwise path ---
    B, C_in, C_out, T = 2, 4, 8, 16
    K, stride, padding, dilation = 3, 1, 2, 2
    x = jax.random.normal(k1, (B, C_in, T), jnp.float32)
    params = make_params(k2, C_in, C_out, K)
    out = jax.block_until_ready(depthwise_separable_conv(
        x, params, kernel_size=K, stride=stride, padding=padding, dilation=dilation))
    ref = _reference(x, params, kernel_size=K, stride=stride, padding=padding,
                     dilation=dilation)
    assert out.shape == ref.shape, (out.shape, ref.shape)
    assert jnp.allclose(out, ref, atol=1e-4, rtol=1e-4), \
        float(jnp.max(jnp.abs(out - ref)))

    # --- config 2: time-tiled path (3 tiles, halo stitching, partial last tile) ---
    B, C_in, C_out, T = 1, 4, 8, 300
    K, stride, padding, dilation = 3, 1, 1, 2
    x = jax.random.normal(k3, (B, C_in, T), jnp.float32)
    params = make_params(k4, C_in, C_out, K)
    out = jax.block_until_ready(depthwise_separable_conv(
        x, params, kernel_size=K, stride=stride, padding=padding, dilation=dilation,
        block_t=128))
    ref = _reference(x, params, kernel_size=K, stride=stride, padding=padding,
                     dilation=dilation)
    assert out.shape == ref.shape, (out.shape, ref.shape)
    assert jnp.allclose(out, ref, atol=1e-4, rtol=1e-4), \
        float(jnp.max(jnp.abs(out - ref)))

    # --- config 3: larger channels -> MXU pointwise matmul with bf16 operands / f32 accum ---
    B, C_in, C_out, T = 1, 64, 64, 256
    K, stride, padding, dilation = 3, 1, 1, 1
    x = jax.random.normal(k5, (B, C_in, T), jnp.float32)
    params = make_params(k6, C_in, C_out, K)
    out = jax.block_until_ready(depthwise_separable_conv(
        x, params, kernel_size=K, stride=stride, padding=padding, dilation=dilation,
        block_t=128, mxu_operand_dtype=jnp.bfloat16))
    ref = _reference(x, params, kernel_size=K, stride=stride, padding=padding,
                     dilation=dilation, pointwise_dtype=jnp.bfloat16)
    assert out.shape == ref.shape, (out.shape, ref.shape)
    assert jnp.allclose(out, ref, atol=2e-2, rtol=2e-2), \
        float(jnp.max(jnp.abs(out - ref)))

    print("KERNEL_OK")
</pallas_src>

<mosaic_0001>
module attributes {stable_mosaic.version = 11 : i64} {
  func.func @kernel(%arg0: i32, %arg1: i32, %arg2: memref<1x4x20xf32, #tpu.memory_space<vmem>>, %arg3: memref<4x3xf32, #tpu.memory_space<vmem>>, %arg4: memref<4x1xf32, #tpu.memory_space<vmem>>, %arg5: memref<4x1xf32, #tpu.memory_space<vmem>>, %arg6: memref<4x1xf32, #tpu.memory_space<vmem>>, %arg7: memref<8x4xf32, #tpu.memory_space<vmem>>, %arg8: memref<8x1xf32, #tpu.memory_space<vmem>>, %arg9: memref<8x1xf32, #tpu.memory_space<vmem>>, %arg10: memref<8x1xf32, #tpu.memory_space<vmem>>, %arg11: memref<1x8x16xf32, #tpu.memory_space<vmem>>) attributes {dimension_semantics = [#tpu.dimension_semantics<parallel>, #tpu.dimension_semantics<parallel>], iteration_bounds = array<i64: 2, 1>, scalar_prefetch = 0 : i64, scratch_operands = 0 : i64, tpu.core_type = #tpu.core_type<tc>, window_params = [{transform_indices = @transform_0, window_bounds = array<i64: 1, 4, 20>}, {pipeline_mode = #tpu.pipeline_mode<synchronous>, transform_indices = @transform_1, window_bounds = array<i64: 4, 3>}, {pipeline_mode = #tpu.pipeline_mode<synchronous>, transform_indices = @transform_2, window_bounds = array<i64: 4, 1>}, {pipeline_mode = #tpu.pipeline_mode<synchronous>, transform_indices = @transform_3, window_bounds = array<i64: 4, 1>}, {pipeline_mode = #tpu.pipeline_mode<synchronous>, transform_indices = @transform_4, window_bounds = array<i64: 4, 1>}, {pipeline_mode = #tpu.pipeline_mode<synchronous>, transform_indices = @transform_5, window_bounds = array<i64: 8, 4>}, {pipeline_mode = #tpu.pipeline_mode<synchronous>, transform_indices = @transform_6, window_bounds = array<i64: 8, 1>}, {pipeline_mode = #tpu.pipeline_mode<synchronous>, transform_indices = @transform_7, window_bounds = array<i64: 8, 1>}, {pipeline_mode = #tpu.pipeline_mode<synchronous>, transform_indices = @transform_8, window_bounds = array<i64: 8, 1>}, {transform_indices = @transform_9, window_bounds = array<i64: 1, 8, 16>}]} {
    %c0 = arith.constant 0 : index
    %c0_0 = arith.constant 0 : index
    %c0_1 = arith.constant 0 : index
    %0 = vector.load %arg2[%c0, %c0_0, %c0_1] : memref<1x4x20xf32, #tpu.memory_space<vmem>>, vector<1x4x20xf32>
    %1 = vector.shape_cast %0 : vector<1x4x20xf32> to vector<4x20xf32>
    %c0_2 = arith.constant 0 : index
    %c0_3 = arith.constant 0 : index
    %2 = vector.load %arg3[%c0_2, %c0_3] : memref<4x3xf32, #tpu.memory_space<vmem>>, vector<4x3xf32>
    %cst = arith.constant 0.000000e+00 : f32
    %3 = vector.broadcast %cst : f32 to vector<4x16xf32>
    %4 = vector.extract_strided_slice %1 {offsets = [0, 0], sizes = [4, 16], strides = [1, 1]} : vector<4x20xf32> to vector<4x16xf32>
    %5 = vector.extract_strided_slice %2 {offsets = [0, 0], sizes = [4, 1], strides = [1, 1]} : vector<4x3xf32> to vector<4x1xf32>
    %6 = vector.broadcast %5 : vector<4x1xf32> to vector<4x16xf32>
    %7 = arith.mulf %6, %4 : vector<4x16xf32>
    %8 = arith.addf %3, %7 : vector<4x16xf32>
    %9 = vector.extract_strided_slice %1 {offsets = [0, 2], sizes = [4, 16], strides = [1, 1]} : vector<4x20xf32> to vector<4x16xf32>
    %10 = vector.extract_strided_slice %2 {offsets = [0, 1], sizes = [4, 1], strides = [1, 1]} : vector<4x3xf32> to vector<4x1xf32>
    %11 = vector.broadcast %10 : vector<4x1xf32> to vector<4x16xf32>
    %12 = arith.mulf %11, %9 : vector<4x16xf32>
    %13 = arith.addf %8, %12 : vector<4x16xf32>
    %14 = vector.extract_strided_slice %1 {offsets = [0, 4], sizes = [4, 16], strides = [1, 1]} : vector<4x20xf32> to vector<4x16xf32>
    %15 = vector.extract_strided_slice %2 {offsets = [0, 2], sizes = [4, 1], strides = [1, 1]} : vector<4x3xf32> to vector<4x1xf32>
    %16 = vector.broadcast %15 : vector<4x1xf32> to vector<4x16xf32>
    %17 = arith.mulf %16, %14 : vector<4x16xf32>
    %18 = arith.addf %13, %17 : vector<4x16xf32>
    %c0_4 = arith.constant 0 : index
    %c0_5 = arith.constant 0 : index
    %19 = vector.load %arg4[%c0_4, %c0_5] : memref<4x1xf32, #tpu.memory_space<vmem>>, vector<4x1xf32>
    %20 = vector.broadcast %19 : vector<4x1xf32> to vector<4x16xf32>
    %21 = arith.addf %18, %20 : vector<4x16xf32>
    %cst_6 = arith.constant dense<0.000000e+00> : vector<16xf32>
    %22 = vector.multi_reduction <add>, %21, %cst_6 [0] : vector<4x16xf32> to vector<16xf32>
    %23 = vector.shape_cast %22 : vector<16xf32> to vector<1x16xf32>
    %cst_7 = arith.constant 2.500000e-01 : f32
    %24 = vector.broadcast %cst_7 : f32 to vector<1x16xf32>
    %25 = arith.mulf %23, %24 : vector<1x16xf32>
    %26 = arith.mulf %21, %21 : vector<4x16xf32>
    %cst_8 = arith.constant dense<0.000000e+00> : vector<16xf32>
    %27 = vector.multi_reduction <add>, %26, %cst_8 [0] : vector<4x16xf32> to vector<16xf32>
    %28 = vector.shape_cast %27 : vector<16xf32> to vector<1x16xf32>
    %cst_9 = arith.constant 2.500000e-01 : f32
    %29 = vector.broadcast %cst_9 : f32 to vector<1x16xf32>
    %30 = arith.mulf %28, %29 : vector<1x16xf32>
    %31 = arith.mulf %25, %25 : vector<1x16xf32>
    %32 = arith.subf %30, %31 : vector<1x16xf32>
    %cst_10 = arith.constant 0.000000e+00 : f32
    %33 = vector.broadcast %cst_10 : f32 to vector<1x16xf32>
    %34 = arith.maximumf %32, %33 : vector<1x16xf32>
    %35 = vector.broadcast %25 : vector<1x16xf32> to vector<4x16xf32>
    %36 = arith.subf %21, %35 : vector<4x16xf32>
    %cst_11 = arith.constant 9.99999974E-6 : f32
    %37 = vector.broadcast %cst_11 : f32 to vector<1x16xf32>
    %38 = arith.addf %34, %37 : vector<1x16xf32>
    %39 = math.rsqrt %38 : vector<1x16xf32>
    %40 = vector.broadcast %39 : vector<1x16xf32> to vector<4x16xf32>
    %41 = arith.mulf %36, %40 : vector<4x16xf32>
    %c0_12 = arith.constant 0 : index
    %c0_13 = arith.constant 0 : index
    %42 = vector.load %arg5[%c0_12, %c0_13] : memref<4x1xf32, #tpu.memory_space<vmem>>, vector<4x1xf32>
    %43 = vector.broadcast %42 : vector<4x1xf32> to vector<4x16xf32>
    %44 = arith.mulf %41, %43 : vector<4x16xf32>
    %c0_14 = arith.constant 0 : index
    %c0_15 = arith.constant 0 : index
    %45 = vector.load %arg6[%c0_14, %c0_15] : memref<4x1xf32, #tpu.memory_space<vmem>>, vector<4x1xf32>
    %46 = vector.broadcast %45 : vector<4x1xf32> to vector<4x16xf32>
    %47 = arith.addf %44, %46 : vector<4x16xf32>
    %cst_16 = arith.constant 0.000000e+00 : f32
    %48 = vector.broadcast %cst_16 : f32 to vector<4x16xf32>
    %49 = arith.maximumf %47, %48 : vector<4x16xf32>
    %c0_17 = arith.constant 0 : index
    %c0_18 = arith.constant 0 : index
    %50 = vector.load %arg7[%c0_17, %c0_18] : memref<8x4xf32, #tpu.memory_space<vmem>>, vector<8x4xf32>
    %cst_19 = arith.constant 0.000000e+00 : f32
    %51 = vector.broadcast %cst_19 : f32 to vector<8x16xf32>
    %52 = vector.extract_strided_slice %50 {offsets = [0, 0], sizes = [8, 1], strides = [1, 1]} : vector<8x4xf32> to vector<8x1xf32>
    %53 = vector.extract_strided_slice %49 {offsets = [0, 0], sizes = [1, 16], strides = [1, 1]} : vector<4x16xf32> to vector<1x16xf32>
    %54 = vector.broadcast %52 : vector<8x1xf32> to vector<8x16xf32>
    %55 = vector.broadcast %53 : vector<1x16xf32> to vector<8x16xf32>
    %56 = arith.mulf %54, %55 : vector<8x16xf32>
    %57 = arith.addf %51, %56 : vector<8x16xf32>
    %58 = vector.extract_strided_slice %50 {offsets = [0, 1], sizes = [8, 1], strides = [1, 1]} : vector<8x4xf32> to vector<8x1xf32>
    %59 = vector.extract_strided_slice %49 {offsets = [1, 0], sizes = [1, 16], strides = [1, 1]} : vector<4x16xf32> to vector<1x16xf32>
    %60 = vector.broadcast %58 : vector<8x1xf32> to vector<8x16xf32>
    %61 = vector.broadcast %59 : vector<1x16xf32> to vector<8x16xf32>
    %62 = arith.mulf %60, %61 : vector<8x16xf32>
    %63 = arith.addf %57, %62 : vector<8x16xf32>
    %64 = vector.extract_strided_slice %50 {offsets = [0, 2], sizes = [8, 1], strides = [1, 1]} : vector<8x4xf32> to vector<8x1xf32>
    %65 = vector.extract_strided_slice %49 {offsets = [2, 0], sizes = [1, 16], strides = [1, 1]} : vector<4x16xf32> to vector<1x16xf32>
    %66 = vector.broadcast %64 : vector<8x1xf32> to vector<8x16xf32>
    %67 = vector.broadcast %65 : vector<1x16xf32> to vector<8x16xf32>
    %68 = arith.mulf %66, %67 : vector<8x16xf32>
    %69 = arith.addf %63, %68 : vector<8x16xf32>
    %70 = vector.extract_strided_slice %50 {offsets = [0, 3], sizes = [8, 1], strides = [1, 1]} : vector<8x4xf32> to vector<8x1xf32>
    %71 = vector.extract_strided_slice %49 {offsets = [3, 0], sizes = [1, 16], strides = [1, 1]} : vector<4x16xf32> to vector<1x16xf32>
    %72 = vector.broadcast %70 : vector<8x1xf32> to vector<8x16xf32>
    %73 = vector.broadcast %71 : vector<1x16xf32> to vector<8x16xf32>
    %74 = arith.mulf %72, %73 : vector<8x16xf32>
    %75 = arith.addf %69, %74 : vector<8x16xf32>
    %c0_20 = arith.constant 0 : index
    %c0_21 = arith.constant 0 : index
    %76 = vector.load %arg8[%c0_20, %c0_21] : memref<8x1xf32, #tpu.memory_space<vmem>>, vector<8x1xf32>
    %77 = vector.broadcast %76 : vector<8x1xf32> to vector<8x16xf32>
    %78 = arith.addf %75, %77 : vector<8x16xf32>
    %cst_22 = arith.constant dense<0.000000e+00> : vector<16xf32>
    %79 = vector.multi_reduction <add>, %78, %cst_22 [0] : vector<8x16xf32> to vector<16xf32>
    %80 = vector.shape_cast %79 : vector<16xf32> to vector<1x16xf32>
    %cst_23 = arith.constant 1.250000e-01 : f32
    %81 = vector.broadcast %cst_23 : f32 to vector<1x16xf32>
    %82 = arith.mulf %80, %81 : vector<1x16xf32>
    %83 = arith.mulf %78, %78 : vector<8x16xf32>
    %cst_24 = arith.constant dense<0.000000e+00> : vector<16xf32>
    %84 = vector.multi_reduction <add>, %83, %cst_24 [0] : vector<8x16xf32> to vector<16xf32>
    %85 = vector.shape_cast %84 : vector<16xf32> to vector<1x16xf32>
    %cst_25 = arith.constant 1.250000e-01 : f32
    %86 = vector.broadcast %cst_25 : f32 to vector<1x16xf32>
    %87 = arith.mulf %85, %86 : vector<1x16xf32>
    %88 = arith.mulf %82, %82 : vector<1x16xf32>
    %89 = arith.subf %87, %88 : vector<1x16xf32>
    %cst_26 = arith.constant 0.000000e+00 : f32
    %90 = vector.broadcast %cst_26 : f32 to vector<1x16xf32>
    %91 = arith.maximumf %89, %90 : vector<1x16xf32>
    %92 = vector.broadcast %82 : vector<1x16xf32> to vector<8x16xf32>
    %93 = arith.subf %78, %92 : vector<8x16xf32>
    %cst_27 = arith.constant 9.99999974E-6 : f32
    %94 = vector.broadcast %cst_27 : f32 to vector<1x16xf32>
    %95 = arith.addf %91, %94 : vector<1x16xf32>
    %96 = math.rsqrt %95 : vector<1x16xf32>
    %97 = vector.broadcast %96 : vector<1x16xf32> to vector<8x16xf32>
    %98 = arith.mulf %93, %97 : vector<8x16xf32>
    %c0_28 = arith.constant 0 : index
    %c0_29 = arith.constant 0 : index
    %99 = vector.load %arg9[%c0_28, %c0_29] : memref<8x1xf32, #tpu.memory_space<vmem>>, vector<8x1xf32>
    %100 = vector.broadcast %99 : vector<8x1xf32> to vector<8x16xf32>
    %101 = arith.mulf %98, %100 : vector<8x16xf32>
    %c0_30 = arith.constant 0 : index
    %c0_31 = arith.constant 0 : index
    %102 = vector.load %arg10[%c0_30, %c0_31] : memref<8x1xf32, #tpu.memory_space<vmem>>, vector<8x1xf32>
    %103 = vector.broadcast %102 : vector<8x1xf32> to vector<8x16xf32>
    %104 = arith.addf %101, %103 : vector<8x16xf32>
    %cst_32 = arith.constant 0.000000e+00 : f32
    %105 = vector.broadcast %cst_32 : f32 to vector<8x16xf32>
    %106 = arith.maximumf %104, %105 : vector<8x16xf32>
    %c0_33 = arith.constant 0 : index
    %c0_34 = arith.constant 0 : index
    %c0_35 = arith.constant 0 : index
    %107 = vector.load %arg11[%c0_33, %c0_34, %c0_35] : memref<1x8x16xf32, #tpu.memory_space<vmem>>, vector<1x8x16xf32>
    %108 = vector.shape_cast %107 : vector<1x8x16xf32> to vector<8x16xf32>
    %109 = vector.shape_cast %106 : vector<8x16xf32> to vector<1x8x16xf32>
    tpu.vector_store %arg11[%c0_33, %c0_34, %c0_35], %109 {strides = array<i32>} : memref<1x8x16xf32, #tpu.memory_space<vmem>>, vector<1x8x16xf32>,
    return
  }
  func.func @transform_0(%arg0: i32, %arg1: i32) -> (i32, i32, i32) {
    %c0_i32 = arith.constant 0 : i32
    %c0_i32_0 = arith.constant 0 : i32
    %c0_i32_1 = arith.constant 0 : i32
    return %arg0, %c0_i32, %c0_i32_0 : i32, i32, i32
  }
  func.func @transform_1(%arg0: i32, %arg1: i32) -> (i32, i32) {
    %c0_i32 = arith.constant 0 : i32
    %c0_i32_0 = arith.constant 0 : i32
    %c0_i32_1 = arith.constant 0 : i32
    return %c0_i32, %c0_i32_0 : i32, i32
  }
  func.func @transform_2(%arg0: i32, %arg1: i32) -> (i32, i32) {
    %c0_i32 = arith.constant 0 : i32
    %c0_i32_0 = arith.constant 0 : i32
    %c0_i32_1 = arith.constant 0 : i32
    return %c0_i32, %c0_i32_0 : i32, i32
  }
  func.func @transform_3(%arg0: i32, %arg1: i32) -> (i32, i32) {
    %c0_i32 = arith.constant 0 : i32
    %c0_i32_0 = arith.constant 0 : i32
    %c0_i32_1 = arith.constant 0 : i32
    return %c0_i32, %c0_i32_0 : i32, i32
  }
  func.func @transform_4(%arg0: i32, %arg1: i32) -> (i32, i32) {
    %c0_i32 = arith.constant 0 : i32
    %c0_i32_0 = arith.constant 0 : i32
    %c0_i32_1 = arith.constant 0 : i32
    return %c0_i32, %c0_i32_0 : i32, i32
  }
  func.func @transform_5(%arg0: i32, %arg1: i32) -> (i32, i32) {
    %c0_i32 = arith.constant 0 : i32
    %c0_i32_0 = arith.constant 0 : i32
    %c0_i32_1 = arith.constant 0 : i32
    return %c0_i32, %c0_i32_0 : i32, i32
  }
  func.func @transform_6(%arg0: i32, %arg1: i32) -> (i32, i32) {
    %c0_i32 = arith.constant 0 : i32
    %c0_i32_0 = arith.constant 0 : i32
    %c0_i32_1 = arith.constant 0 : i32
    return %c0_i32, %c0_i32_0 : i32, i32
  }
  func.func @transform_7(%arg0: i32, %arg1: i32) -> (i32, i32) {
    %c0_i32 = arith.constant 0 : i32
    %c0_i32_0 = arith.constant 0 : i32
    %c0_i32_1 = arith.constant 0 : i32
    return %c0_i32, %c0_i32_0 : i32, i32
  }
  func.func @transform_8(%arg0: i32, %arg1: i32) -> (i32, i32) {
    %c0_i32 = arith.constant 0 : i32
    %c0_i32_0 = arith.constant 0 : i32
    %c0_i32_1 = arith.constant 0 : i32
    return %c0_i32, %c0_i32_0 : i32, i32
  }
  func.func @transform_9(%arg0: i32, %arg1: i32) -> (i32, i32, i32) {
    %c0_i32 = arith.constant 0 : i32
    %c0_i32_0 = arith.constant 0 : i32
    return %arg0, %c0_i32, %arg1 : i32, i32, i32
  }
}

</mosaic_0001>

<llo_original>
// kernel: tpu_custom_call.1
$region0: #{tpu_custom_call.1}
  #allocation0 [shape = 'u32[]', space=smem, size = 0x4, offset = 0x4, fixed_abs, tag = 'smem constant byte address 0x4 - core index']
  #allocation1 [shape = 'u32[144,128]{1,0:T(1,128)}', space=vmem, size = 0x12000, scoped, tag = 'internal scratch']
  %s0 = inlined_call_operand.vmem [shape: f32[2,4,20], index: 0, kind: input, shape index: {}]
  %s1 = inlined_call_operand.vmem [shape: f32[4,3], index: 1, kind: input, shape index: {}]
  %s2 = inlined_call_operand.vmem [shape: f32[4,1], index: 2, kind: input, shape index: {}]
  %s3 = inlined_call_operand.vmem [shape: f32[4,1], index: 3, kind: input, shape index: {}]
  %s4 = inlined_call_operand.vmem [shape: f32[4,1], index: 4, kind: input, shape index: {}]
  %s5 = inlined_call_operand.vmem [shape: f32[8,4], index: 5, kind: input, shape index: {}]
  %s6 = inlined_call_operand.vmem [shape: f32[8,1], index: 6, kind: input, shape index: {}]
  %s7 = inlined_call_operand.vmem [shape: f32[8,1], index: 7, kind: input, shape index: {}]
  %s8 = inlined_call_operand.vmem [shape: f32[8,1], index: 8, kind: input, shape index: {}]
  %s9 = inlined_call_operand.hbm [shape: f32[2,8,16], index: 9, kind: output, shape index: {}]
  %s10 = sld [smem:[#allocation0]]
  $region69: #{tpu_custom_call.1} parent=0
    _
  %s12 = ssub.s32 1, %s10
  %s13 = scalar_select 0, %s12, %s10
  $region1: #{tpu_custom_call.1} parent=0
    #allocation2 [shape = 'u8[8192]{0}', space=vmem, size = 0x2000, scoped, tag = 'output window, operand 0']
    #allocation3 [shape = 's32[2]{0}', space=sflag, size = 0x8, scoped, tag = 'scoped memory for tpu_custom_call.1']
    %14 = vsyncpa [#allocation3], 0
    %s15 = scalar_lea.sflag [#allocation3], 1
    %16 = vsyncpa %s15, 0
    loop: start=0, step=1, limit=4
    $region2: #{tpu_custom_call.1} parent=1 // loop_pre_header
      _
    $region3: #{tpu_custom_call.1} parent=1 // loop_header
      %s18 = sphi 0, %s22
      %p19 = scmp.ge.s32.totalorder %s18, 4
      %s25 = sphi 0, %s37
      %s26 = sphi 0, %s33
      %s27 = sphi 0, %s25
      %s28 = sphi 0, %s26
      %s29 = sphi 0, %s27
      %s30 = sphi 0, %s28
      %s40 = sphi 0, %s42
      %s43 = sphi 0, %s40
      %s44 = sphi 0, %s43
      %s60 = sphi 0, %s44
      %s64 = sphi 0, %s64
      %s66 = sphi 0, %s64
      %s67 = sphi 0, %s66
      %s81 = sphi 0, %s67
      %s85 = sphi 0, %s85
      %s87 = sphi 0, %s85
      %s88 = sphi 0, %s87
      %s102 = sphi 0, %s88
      %s106 = sphi 0, %s106
      %s108 = sphi 0, %s106
      %s109 = sphi 0, %s108
      %s123 = sphi 0, %s109
      %s127 = sphi 0, %s127
      %s129 = sphi 0, %s127
      %s130 = sphi 0, %s129
      %s144 = sphi 0, %s130
      %s148 = sphi 0, %s148
      %s150 = sphi 0, %s148
      %s151 = sphi 0, %s150
      %s165 = sphi 0, %s151
      %s169 = sphi 0, %s169
      %s171 = sphi 0, %s169
      %s172 = sphi 0, %s171
      %s186 = sphi 0, %s172
      %s190 = sphi 0, %s190
      %s192 = sphi 0, %s190
      %s193 = sphi 0, %s192
      %s207 = sphi 0, %s193
      %s211 = sphi 0, %s211
      %s213 = sphi 0, %s211
      %s214 = sphi 0, %s213
      %s228 = sphi 0, %s214
      %s236 = sphi 0, %s238
      %s239 = sphi 0, %s236
      %s240 = sphi 0, %s239
      %s256 = sphi 0, %s240
    $region4: #{tpu_custom_call.1} parent=1 // loop_header_branch
      %21 = sbr.rel (%p19) target = $region8
    $region5: #{tpu_custom_call.1} parent=1 // loop_body
      %s23 = ssub.s32 %s18, 1
      %s24 = ssub.s32 %s18, 2
      %s31 = sadd.s32 1, %s26
      %p32 = scmp.ge.s32.totalorder %s31, 1
      %s33 = scalar_select %p32, 0, %s31
      %s34 = sadd.s32 1, %s25
      %s35 = scalar_select %p32, %s34, %s25
      %p36 = scmp.ge.s32.totalorder %s35, 2
      %s37 = scalar_select %p36, 0, %s35
      %s38 = ssub.s32 %s25, %s37
      %p39 = scmp.eq.s32.totalorder %s38, 0
      %s41 = sadd.s32 %s40, 1
      %s42 = scalar_select %p39, %s40, %s41
      %p45 = pneg %p39
      %p46 = scmp.eq.s32.totalorder %s18, 1
      %p47 = por %p45, %p46
      %p48 = scmp.ne.s32.totalorder %s40, %s43
      %p49 = scmp.eq.s32.totalorder %s18, 0
      %p50 = por %p48, %p49
      %p51 = scmp.ne.s32.totalorder %s40, %s43
      %p52 = scmp.eq.s32.totalorder %s23, 1
      %p53 = por %p51, %p52
      %p54 = scmp.ne.s32.totalorder %s43, %s44
      %p55 = scmp.eq.s32.totalorder %s23, 0
      %p56 = por %p54, %p55
      %p57 = scmp.ne.s32.totalorder %s43, %s44
      %p58 = scmp.eq.s32.totalorder %s24, 1
      %p59 = por %p57, %p58
      %p61 = scmp.ne.s32.totalorder %s44, %s60
      %p62 = scmp.eq.s32.totalorder %s24, 0
      %p63 = por %p61, %p62
      %s65 = sadd.s32 %s64, 1
      %p68 = scmp.eq.s32.totalorder %s18, 1
      %p69 = scmp.ne.s32.totalorder %s64, %s66
      %p70 = scmp.eq.s32.totalorder %s18, 0
      %p71 = por %p69, %p70
      %p72 = scmp.ne.s32.totalorder %s64, %s66
      %p73 = scmp.eq.s32.totalorder %s23, 1
      %p74 = por %p72, %p73
      %p75 = scmp.ne.s32.totalorder %s66, %s67
      %p76 = scmp.eq.s32.totalorder %s23, 0
      %p77 = por %p75, %p76
      %p78 = scmp.ne.s32.totalorder %s66, %s67
      %p79 = scmp.eq.s32.totalorder %s24, 1
      %p80 = por %p78, %p79
      %p82 = scmp.ne.s32.totalorder %s67, %s81
      %p83 = scmp.eq.s32.totalorder %s24, 0
      %p84 = por %p82, %p83
      %s86 = sadd.s32 %s85, 1
      %p89 = scmp.eq.s32.totalorder %s18, 1
      %p90 = scmp.ne.s32.totalorder %s85, %s87
      %p91 = scmp.eq.s32.totalorder %s18, 0
      %p92 = por %p90, %p91
      %p93 = scmp.ne.s32.totalorder %s85, %s87
      %p94 = scmp.eq.s32.totalorder %s23, 1
      %p95 = por %p93, %p94
      %p96 = scmp.ne.s32.totalorder %s87, %s88
      %p97 = scmp.eq.s32.totalorder %s23, 0
      %p98 = por %p96, %p97
      %p99 = scmp.ne.s32.totalorder %s87, %s88
      %p100 = scmp.eq.s32.totalorder %s24, 1
      %p101 = por %p99, %p100
      %p103 = scmp.ne.s32.totalorder %s88, %s102
      %p104 = scmp.eq.s32.totalorder %s24, 0
      %p105 = por %p103, %p104
      %s107 = sadd.s32 %s106, 1
      %p110 = scmp.eq.s32.totalorder %s18, 1
      %p111 = scmp.ne.s32.totalorder %s106, %s108
      %p112 = scmp.eq.s32.totalorder %s18, 0
      %p113 = por %p111, %p112
      %p114 = scmp.ne.s32.totalorder %s106, %s108
      %p115 = scmp.eq.s32.totalorder %s23, 1
      %p116 = por %p114, %p115
      %p117 = scmp.ne.s32.totalorder %s108, %s109
      %p118 = scmp.eq.s32.totalorder %s23, 0
      %p119 = por %p117, %p118
      %p120 = scmp.ne.s32.totalorder %s108, %s109
      %p121 = scmp.eq.s32.totalorder %s24, 1
      %p122 = por %p120, %p121
      %p124 = scmp.ne.s32.totalorder %s109, %s123
      %p125 = scmp.eq.s32.totalorder %s24, 0
      %p126 = por %p124, %p125
      %s128 = sadd.s32 %s127, 1
      %p131 = scmp.eq.s32.totalorder %s18, 1
      %p132 = scmp.ne.s32.totalorder %s127, %s129
      %p133 = scmp.eq.s32.totalorder %s18, 0
      %p134 = por %p132, %p133
      %p135 = scmp.ne.s32.totalorder %s127, %s129
      %p136 = scmp.eq.s32.totalorder %s23, 1
      %p137 = por %p135, %p136
      %p138 = scmp.ne.s32.totalorder %s129, %s130
      %p139 = scmp.eq.s32.totalorder %s23, 0
      %p140 = por %p138, %p139
      %p141 = scmp.ne.s32.totalorder %s129, %s130
      %p142 = scmp.eq.s32.totalorder %s24, 1
      %p143 = por %p141, %p142
      %p145 = scmp.ne.s32.totalorder %s130, %s144
      %p146 = scmp.eq.s32.totalorder %s24, 0
      %p147 = por %p145, %p146
      %s149 = sadd.s32 %s148, 1
      %p152 = scmp.eq.s32.totalorder %s18, 1
      %p153 = scmp.ne.s32.totalorder %s148, %s150
      %p154 = scmp.eq.s32.totalorder %s18, 0
      %p155 = por %p153, %p154
      %p156 = scmp.ne.s32.totalorder %s148, %s150
      %p157 = scmp.eq.s32.totalorder %s23, 1
      %p158 = por %p156, %p157
      %p159 = scmp.ne.s32.totalorder %s150, %s151
      %p160 = scmp.eq.s32.totalorder %s23, 0
      %p161 = por %p159, %p160
      %p162 = scmp.ne.s32.totalorder %s150, %s151
      %p163 = scmp.eq.s32.totalorder %s24, 1
      %p164 = por %p162, %p163
      %p166 = scmp.ne.s32.totalorder %s151, %s165
      %p167 = scmp.eq.s32.totalorder %s24, 0
      %p168 = por %p166, %p167
      %s170 = sadd.s32 %s169, 1
      %p173 = scmp.eq.s32.totalorder %s18, 1
      %p174 = scmp.ne.s32.totalorder %s169, %s171
      %p175 = scmp.eq.s32.totalorder %s18, 0
      %p176 = por %p174, %p175
      %p177 = scmp.ne.s32.totalorder %s169, %s171
      %p178 = scmp.eq.s32.totalorder %s23, 1
      %p179 = por %p177, %p178
      %p180 = scmp.ne.s32.totalorder %s171, %s172
      %p181 = scmp.eq.s32.totalorder %s23, 0
      %p182 = por %p180, %p181
      %p183 = scmp.ne.s32.totalorder %s171, %s172
      %p184 = scmp.eq.s32.totalorder %s24, 1
      %p185 = por %p183, %p184
      %p187 = scmp.ne.s32.totalorder %s172, %s186
      %p188 = scmp.eq.s32.totalorder %s24, 0
      %p189 = por %p187, %p188
      %s191 = sadd.s32 %s190, 1
      %p194 = scmp.eq.s32.totalorder %s18, 1
      %p195 = scmp.ne.s32.totalorder %s190, %s192
      %p196 = scmp.eq.s32.totalorder %s18, 0
      %p197 = por %p195, %p196
      %p198 = scmp.ne.s32.totalorder %s190, %s192
      %p199 = scmp.eq.s32.totalorder %s23, 1
      %p200 = por %p198, %p199
      %p201 = scmp.ne.s32.totalorder %s192, %s193
      %p202 = scmp.eq.s32.totalorder %s23, 0
      %p203 = por %p201, %p202
      %p204 = scmp.ne.s32.totalorder %s192, %s193
      %p205 = scmp.eq.s32.totalorder %s24, 1
      %p206 = por %p204, %p205
      %p208 = scmp.ne.s32.totalorder %s193, %s207
      %p209 = scmp.eq.s32.totalorder %s24, 0
      %p210 = por %p208, %p209
      %s212 = sadd.s32 %s211, 1
      %p215 = scmp.eq.s32.totalorder %s18, 1
      %p216 = scmp.ne.s32.totalorder %s211, %s213
      %p217 = scmp.eq.s32.totalorder %s18, 0
      %p218 = por %p216, %p217
      %p219 = scmp.ne.s32.totalorder %s211, %s213
      %p220 = scmp.eq.s32.totalorder %s23, 1
      %p221 = por %p219, %p220
      %p222 = scmp.ne.s32.totalorder %s213, %s214
      %p223 = scmp.eq.s32.totalorder %s23, 0
      %p224 = por %p222, %p223
      %p225 = scmp.ne.s32.totalorder %s213, %s214
      %p226 = scmp.eq.s32.totalorder %s24, 1
      %p227 = por %p225, %p226
      %p229 = scmp.ne.s32.totalorder %s214, %s228
      %p230 = scmp.eq.s32.totalorder %s24, 0
      %p231 = por %p229, %p230
      %s232 = ssub.s32 %s25, %s37
      %s233 = ssub.s32 %s26, %s33
      %s234 = sor.u32 %s232, %s233
      %p235 = scmp.eq.s32.totalorder %s234, 0
      %s237 = sadd.s32 %s236, 1
      %s238 = scalar_select %p235, %s236, %s237
      %p241 = pneg %p235
      %p242 = scmp.eq.s32.totalorder %s18, 1
      %p243 = por %p241, %p242
      %p244 = scmp.ne.s32.totalorder %s236, %s239
      %p245 = scmp.eq.s32.totalorder %s18, 0
      %p246 = por %p244, %p245
      %p247 = scmp.ne.s32.totalorder %s236, %s239
      %p248 = scmp.eq.s32.totalorder %s23, 1
      %p249 = por %p247, %p248
      %p250 = scmp.ne.s32.totalorder %s239, %s240
      %p251 = scmp.eq.s32.totalorder %s23, 0
      %p252 = por %p250, %p251
      %p253 = scmp.ne.s32.totalorder %s239, %s240
      %p254 = scmp.eq.s32.totalorder %s24, 1
      %p255 = por %p253, %p254
      %p257 = scmp.ne.s32.totalorder %s240, %s256
      %p258 = scmp.eq.s32.totalorder %s24, 0
      %p259 = por %p257, %p258
      %p260 = scmp.le.s32.totalorder 1, %s18
      %p261 = scmp.lt.s32.totalorder %s18, 3
      %p262 = pnand %p260, %p261
      %p263 = pneg %p262
      // Predicated region
      $region9: #{tpu_custom_call.1} parent=5 // pred_check
        _
      $region10: #{tpu_custom_call.1} parent=5 // pred_check_branch
        %265 = sbr.rel (%p262) target = $region12
      $region11: #{tpu_custom_call.1} parent=5 // pred_region
        %s266 = ssub.s32 %s18, 1
        // Predicated region
        $region13: #{tpu_custom_call.1} parent=11 // pred_check
          %p267 = pneg %p77
        $region14: #{tpu_custom_call.1} parent=11 // pred_check_branch
          %269 = sbr.rel (%p267) target = $region16
        $region15: #{tpu_custom_call.1} parent=11 // pred_region
          _
        $region16: #{tpu_custom_call.1} parent=11 // pred_fallthru
          _
        // Predicated region
        $region17: #{tpu_custom_call.1} parent=11 // pred_check
          %p270 = pneg %p98
        $region18: #{tpu_custom_call.1} parent=11 // pred_check_branch
          %272 = sbr.rel (%p270) target = $region20
        $region19: #{tpu_custom_call.1} parent=11 // pred_region
          _
        $region20: #{tpu_custom_call.1} parent=11 // pred_fallthru
          _
        // Predicated region
        $region21: #{tpu_custom_call.1} parent=11 // pred_check
          %p273 = pneg %p119
        $region22: #{tpu_custom_call.1} parent=11 // pred_check_branch
          %275 = sbr.rel (%p273) target = $region24
        $region23: #{tpu_custom_call.1} parent=11 // pred_region
          _
        $region24: #{tpu_custom_call.1} parent=11 // pred_fallthru
          _
        // Predicated region
        $region25: #{tpu_custom_call.1} parent=11 // pred_check
          %p276 = pneg %p140
        $region26: #{tpu_custom_call.1} parent=11 // pred_check_branch
          %278 = sbr.rel (%p276) target = $region28
        $region27: #{tpu_custom_call.1} parent=11 // pred_region
          _
        $region28: #{tpu_custom_call.1} parent=11 // pred_fallthru
          _
        // Predicated region
        $region29: #{tpu_custom_call.1} parent=11 // pred_check
          %p279 = pneg %p161
        $region30: #{tpu_custom_call.1} parent=11 // pred_check_branch
          %281 = sbr.rel (%p279) target = $region32
        $region31: #{tpu_custom_call.1} parent=11 // pred_region
          _
        $region32: #{tpu_custom_call.1} parent=11 // pred_fallthru
          _
        // Predicated region
        $region33: #{tpu_custom_call.1} parent=11 // pred_check
          %p282 = pneg %p182
        $region34: #{tpu_custom_call.1} parent=11 // pred_check_branch
          %284 = sbr.rel (%p282) target = $region36
        $region35: #{tpu_custom_call.1} parent=11 // pred_region
          _
        $region36: #{tpu_custom_call.1} parent=11 // pred_fallthru
          _
        // Predicated region
        $region37: #{tpu_custom_call.1} parent=11 // pred_check
          %p285 = pneg %p203
        $region38: #{tpu_custom_call.1} parent=11 // pred_check_branch
          %287 = sbr.rel (%p285) target = $region40
        $region39: #{tpu_custom_call.1} parent=11 // pred_region
          _
        $region40: #{tpu_custom_call.1} parent=11 // pred_fallthru
          _
        // Predicated region
        $region41: #{tpu_custom_call.1} parent=11 // pred_check
          %p288 = pneg %p224
        $region42: #{tpu_custom_call.1} parent=11 // pred_check_branch
          %290 = sbr.rel (%p288) target = $region44
        $region43: #{tpu_custom_call.1} parent=11 // pred_region
          _
        $region44: #{tpu_custom_call.1} parent=11 // pred_fallthru
          _
      $region12: #{tpu_custom_call.1} parent=5 // pred_fallthru
        _
      %p291 = scmp.lt.s32.totalorder %s18, 2
      // Predicated region
      $region45: #{tpu_custom_call.1} parent=5 // pred_check
        %p292 = pneg %p291
      $region46: #{tpu_custom_call.1} parent=5 // pred_check_branch
        %294 = sbr.rel (%p292) target = $region48
      $region47: #{tpu_custom_call.1} parent=5 // pred_region
        // Predicated region
        $region49: #{tpu_custom_call.1} parent=47 // pred_check
          %p295 = pneg %p50
        $region50: #{tpu_custom_call.1} parent=47 // pred_check_branch
          %297 = sbr.rel (%p295) target = $region52
        $region51: #{tpu_custom_call.1} parent=47 // pred_region
          %p298 = scmp.lt.s32.totalorder %s25, 1
          %s299 = scalar_select %p298, %s25, 1
          %s300 = smul.addr %s299, 4
          %s301 = scalar_lea.vmem %s0, %s300
        $region52: #{tpu_custom_call.1} parent=47 // pred_fallthru
          _
      $region48: #{tpu_custom_call.1} parent=5 // pred_fallthru
        _
      %p302 = scmp.le.s32.totalorder 1, %s18
      %p303 = scmp.lt.s32.totalorder %s18, 3
      %p304 = pnand %p302, %p303
      %p305 = pneg %p304
      // Predicated region
      $region53: #{tpu_custom_call.1} parent=5 // pred_check
        _
      $region54: #{tpu_custom_call.1} parent=5 // pred_check_branch
        %307 = sbr.rel (%p304) target = $region56
      $region55: #{tpu_custom_call.1} parent=5 // pred_region
        %s308 = ssub.s32 %s18, 1
        %p309 = scmp.lt.s32.totalorder %s27, 1
        %s310 = scalar_select %p309, %s27, 1
        %s311 = smul.addr %s310, 4
        %s312 = scalar_lea.vmem %s0, %s311
        %p313 = pneg %p56
        %p314 = pneg %p53
        %p315 = pneg %p77
        %p316 = pneg %p74
        %p317 = pneg %p98
        %p318 = pneg %p95
        %p319 = pneg %p119
        %p320 = pneg %p116
        %p321 = pneg %p140
        %p322 = pneg %p137
        %p323 = pneg %p161
        %p324 = pneg %p158
        %p325 = pneg %p182
        %p326 = pneg %p179
        %p327 = pneg %p203
        %p328 = pneg %p200
        %p329 = pneg %p224
        %p330 = pneg %p221
        %p331 = pneg %p252
        %p332 = pneg %p249
        %s333 = sand.u32 %s239, 1
        %s334 = scalar_lea.sflag [#allocation3], %s333
        %s335 = sand.u32 %s239, 1
        %s336 = smul.addr %s335, 8
        %s337 = scalar_lea.vmem [#allocation2], %s336
        %p338 = scmp.lt.s32.totalorder %s27, 1
        %s339 = scalar_select %p338, %s27, 1
        %s340 = smul.addr %s339, 4
        %s341 = scalar_lea.vmem %s0, %s340
        %v342 = vld [vmem:[%s341] sm:$0xf]
        %v343 = vld [vmem:[%s1] sm:$0xf]
        %345 = vset.pattern.permute.xlu0 0
        %346 = vperm.xlu0 %345, %v343
        %v347 = vpop.permute.xlu0 %346
        %v349 = vmul.f32 %v347, %v342
        %v350 = vadd.f32 %v349, 0.0
        %351 = vset.pattern.permute.xlu0 1
        %352 = vperm.xlu0 %351, %v343
        %v353 = vpop.permute.xlu0 %352
        %v355 = vmul.f32 %v353, %v342
        %357 = vrot.lane.b32.xlu0 %v355, 126
        %v358 = vpop.permute.xlu0 %357
        %v360 = vadd.f32 %v350, %v358
        %361 = vset.pattern.permute.xlu0 2
        %362 = vperm.xlu0 %361, %v343
        %v363 = vpop.permute.xlu0 %362
        %v365 = vmul.f32 %v363, %v342
        %367 = vrot.lane.b32.xlu0 %v365, 124
        %v368 = vpop.permute.xlu0 %367
        %v370 = vadd.f32 %v360, %v368
        %v371 = vld [vmem:[%s2] sm:$0xf]
        %373 = vset.pattern.permute.xlu0 0
        %374 = vperm.xlu0 %373, %v371
        %v375 = vpop.permute.xlu0 %374
        %v377 = vadd.f32 %v370, %v375
        %vm378 = vcmask 125952
        %v379 = vsel %vm378, %v377, 0.0
        %v380 = vrot.slane %v379, 4
        %v381 = vadd.f32 %v379, %v380
        %v382 = vrot.slane %v381, 2
        %v383 = vadd.f32 %v381, %v382
        %v384 = vrot.slane %v383, 1
        %v385 = vadd.f32 %v383, %v384
        %v386 = vmul.f32 %v385, 0.25
        %v387 = vmul.f32 %v377, %v377
        %v388 = vsel %vm378, %v387, 0.0
        %v389 = vrot.slane %v388, 4
        %v390 = vadd.f32 %v388, %v389
        %v391 = vrot.slane %v390, 2
        %v392 = vadd.f32 %v390, %v391
        %v393 = vrot.slane %v392, 1
        %v394 = vadd.f32 %v392, %v393
        %v395 = vmul.f32 %v394, 0.25
        %v396 = vmul.f32 %v386, %v386
        %v397 = vsub.f32 %v395, %v396
        %v398 = vmax.f32 %v397, 0.0
        %v399 = vsub.f32 %v377, %v386
        %v400 = vadd.f32 %v398, 1e-05
        %v401 = vrsqrt.pop %v400
        %v402 = vmul.f32 %v399, %v401
        %v403 = vld [vmem:[%s3] sm:$0xf]
        %405 = vset.pattern.permute.xlu0 0
        %406 = vperm.xlu0 %405, %v403
        %v407 = vpop.permute.xlu0 %406
        %v409 = vmul.f32 %v402, %v407
        %v410 = vld [vmem:[%s4] sm:$0xf]
        %412 = vset.pattern.permute.xlu0 0
        %413 = vperm.xlu0 %412, %v410
        %v414 = vpop.permute.xlu0 %413
        %v416 = vadd.f32 %v409, %v414
        %v417 = vmax.f32 %v416, 0.0
        %v418 = vld [vmem:[%s5] sm:$0xff]
        %420 = vset.pattern.permute.xlu0 0
        %421 = vperm.xlu0 %420, %v418
        %v422 = vpop.permute.xlu0 %421
        %v424 = vlaneseq
        %v425 = vshrl.u32 %v424, 7
        %v426 = vsub.s32 0, %v425
        %v427 = vrot.slane %v417, %v426
        %v428 = vmul.f32 %v422, %v427
        %v429 = vadd.f32 %v428, 0.0
        %430 = vset.pattern.permute.xlu0 1
        %431 = vperm.xlu0 %430, %v418
        %v432 = vpop.permute.xlu0 %431
        %v434 = vlaneseq
        %v435 = vshrl.u32 %v434, 7
        %v436 = vsub.s32 1, %v435
        %v437 = vrot.slane %v417, %v436
        %v438 = vmul.f32 %v432, %v437
        %v439 = vadd.f32 %v429, %v438
        %440 = vset.pattern.permute.xlu0 2
        %441 = vperm.xlu0 %440, %v418
        %v442 = vpop.permute.xlu0 %441
        %v444 = vlaneseq
        %v445 = vshrl.u32 %v444, 7
        %v446 = vsub.s32 2, %v445
        %v447 = vrot.slane %v417, %v446
        %v448 = vmul.f32 %v442, %v447
        %v449 = vadd.f32 %v439, %v448
        %450 = vset.pattern.permute.xlu0 3
        %451 = vperm.xlu0 %450, %v418
        %v452 = vpop.permute.xlu0 %451
        %v454 = vlaneseq
        %v455 = vshrl.u32 %v454, 7
        %v456 = vsub.s32 3, %v455
        %v457 = vrot.slane %v417, %v456
        %v458 = vmul.f32 %v452, %v457
        %v459 = vadd.f32 %v449, %v458
        %v460 = vld [vmem:[%s6] sm:$0xff]
        %462 = vset.pattern.permute.xlu0 0
        %463 = vperm.xlu0 %462, %v460
        %v464 = vpop.permute.xlu0 %463
        %v466 = vadd.f32 %v459, %v464
        %vm467 = vcmask 130048
        %v468 = vsel %vm467, %v466, 0.0
        %v469 = vrot.slane %v468, 4
        %v470 = vadd.f32 %v468, %v469
        %v471 = vrot.slane %v470, 2
        %v472 = vadd.f32 %v470, %v471
        %v473 = vrot.slane %v472, 1
        %v474 = vadd.f32 %v472, %v473
        %v475 = vmul.f32 %v474, 0.125
        %v476 = vmul.f32 %v466, %v466
        %v477 = vsel %vm467, %v476, 0.0
        %v478 = vrot.slane %v477, 4
        %v479 = vadd.f32 %v477, %v478
        %v480 = vrot.slane %v479, 2
        %v481 = vadd.f32 %v479, %v480
        %v482 = vrot.slane %v481, 1
        %v483 = vadd.f32 %v481, %v482
        %v484 = vmul.f32 %v483, 0.125
        %v485 = vmul.f32 %v475, %v475
        %v486 = vsub.f32 %v484, %v485
        %v487 = vmax.f32 %v486, 0.0
        %v488 = vsub.f32 %v466, %v475
        %v489 = vadd.f32 %v487, 1e-05
        %v490 = vrsqrt.pop %v489
        %v491 = vmul.f32 %v488, %v490
        %v492 = vld [vmem:[%s7] sm:$0xff]
        %494 = vset.pattern.permute.xlu0 0
        %495 = vperm.xlu0 %494, %v492
        %v496 = vpop.permute.xlu0 %495
        %v498 = vmul.f32 %v491, %v496
        %v499 = vld [vmem:[%s8] sm:$0xff]
        %501 = vset.pattern.permute.xlu0 0
        %502 = vperm.xlu0 %501, %v499
        %v503 = vpop.permute.xlu0 %502
        %v505 = vadd.f32 %v498, %v503
        %v506 = vmax.f32 %v505, 0.0
        %507 = vst.msk [vmem:[%s337] sm:$0xff] %vm467, %v506
        %s508 = sand.u32 %s239, 1
        %s509 = scalar_lea.sflag [#allocation3], %s508
        %s510 = sand.u32 %s239, 1
        %s511 = smul.addr %s510, 8
        %s512 = scalar_lea.vmem [#allocation2], %s511
        // Predicated region
        $region57: #{tpu_custom_call.1} parent=55 // pred_check
          %p513 = pneg %p249
        $region58: #{tpu_custom_call.1} parent=55 // pred_check_branch
          %515 = sbr.rel (%p513) target = $region60
        $region59: #{tpu_custom_call.1} parent=55 // pred_region
          %s517 = ssub.s32 128, 128
          %518 = vsyncadd %s509, %s517
          %s519 = sadd.s32 %s28, %s27
          %s520 = smul.addr %s519, 128
          %s521 = scalar_lea.hbm %s9, %s520
          %s523 = sshll.u32 %s512, 4
          %s524 = int_to_ptr.vmem [resolvable:$true] %s523
          %526 = dma.vmem_to_hbm [thread:$0]  %s524, 128, %s521, %s509
        $region60: #{tpu_custom_call.1} parent=55 // pred_fallthru
          _
      $region56: #{tpu_custom_call.1} parent=5 // pred_fallthru
        _
      %p527 = scmp.le.s32.totalorder 2, %s18
      // Predicated region
      $region61: #{tpu_custom_call.1} parent=5 // pred_check
        %p528 = pneg %p527
      $region62: #{tpu_custom_call.1} parent=5 // pred_check_branch
        %530 = sbr.rel (%p528) target = $region64
      $region63: #{tpu_custom_call.1} parent=5 // pred_region
        %s531 = ssub.s32 %s18, 2
        // Predicated region
        $region65: #{tpu_custom_call.1} parent=63 // pred_check
          %p532 = pneg %p255
        $region66: #{tpu_custom_call.1} parent=63 // pred_check_branch
          %534 = sbr.rel (%p532) target = $region68
        $region67: #{tpu_custom_call.1} parent=63 // pred_region
          %s535 = sand.u32 %s240, 1
          %s536 = scalar_lea.sflag [#allocation3], %s535
          %s537 = sand.u32 %s240, 1
          %s538 = smul.addr %s537, 8
          %s539 = scalar_lea.vmem [#allocation2], %s538
          %540 = dma.done %s536, 128
        $region68: #{tpu_custom_call.1} parent=63 // pred_fallthru
          _
      $region64: #{tpu_custom_call.1} parent=5 // pred_fallthru
        _
    $region6: #{tpu_custom_call.1} parent=1 // loop_footer
      %s22 = sadd.s32 1, %s18
    $region7: #{tpu_custom_call.1} parent=1 // loop_footer_branch
      %17 = sbr.rel target = $region3
    $region8: #{tpu_custom_call.1} parent=1 // loop_exit
      _
    %541 = vsyncpa [#allocation3], 1
    %s542 = scalar_lea.sflag [#allocation3], 1
    %543 = vsyncpa %s542, 1

</llo_original>
